<compile_context>
chip_gen: v7x
topology: tpu7x:2x2x1
jax: 0.10.0
libtpu: 0.0.40
codegen_flags: <defaults>
</compile_context>

<pallas_src>
import functools

import jax
import jax.numpy as jnp
from jax.experimental import pallas as pl
from jax.experimental.pallas import tpu as pltpu


def _round_up(x: int, m: int) -> int:
    return ((x + m - 1) // m) * m


def _cdiv(a: int, b: int) -> int:
    return (a + b - 1) // b


def _cost_kernel(logits_ref, qbox_ref, onehot_ref, tbox_ref, ct_ref, *,
                 w_class: float, w_bbox: float, w_giou: float,
                 approx_recip: bool):
    alpha = 0.25

    # ---- classification cost: MXU gather first (onehot @ logits^T), then focal
    #      math on the small (m_pad, tile_n) result.
    g = jax.lax.dot_general(
        onehot_ref[...], logits_ref[...],
        dimension_numbers=(((1,), (1,)), ((), ())),
        preferred_element_type=jnp.float32)                 # (m_pad, tile_n)

    # 3 transcendentals (exp, recip, log) instead of 4; gamma==2 -> squares.
    e = jnp.exp(-g)
    prob = 1.0 / (1.0 + e)
    lp = -jnp.log(prob + 1e-8)            # == -log(sigmoid(g) + 1e-8)
    # -log(1 - prob + 1e-8) == g + lp up to an eps tail that is annihilated by
    # the prob**2 factor below (no NaN/inf for saturated logits).
    pos = alpha * ((1.0 - prob) * (1.0 - prob)) * lp
    neg = (1.0 - alpha) * (prob * prob) * (g + lp)
    cost_class = pos - neg                                   # (m_pad, tile_n)

    # ---- precomputed per-query / per-target box features ----
    qb = qbox_ref[...]                                       # (8, tile_n)
    qcx, qcy, qw, qh = qb[0:1], qb[1:2], qb[2:3], qb[3:4]     # (1, tile_n)
    qx1, qy1, qx2, qy2 = qb[4:5], qb[5:6], qb[6:7], qb[7:8]

    tb = tbox_ref[...]                                       # (m_pad, 8)
    tcx, tcy, tw, th = tb[:, 0:1], tb[:, 1:2], tb[:, 2:3], tb[:, 3:4]  # (m_pad, 1)
    tx1, ty1, tx2, ty2 = tb[:, 4:5], tb[:, 5:6], tb[:, 6:7], tb[:, 7:8]

    # ---- pairwise L1 (cdist p=1) on cxcywh boxes ----
    cost_bbox = (jnp.abs(tcx - qcx) + jnp.abs(tcy - qcy)
                 + jnp.abs(tw - qw) + jnp.abs(th - qh))      # (m_pad, tile_n)

    # ---- generalized box IoU (pairwise, xyxy precomputed in wrapper) ----
    area_q = qw * qh                                         # (1, tile_n)
    area_t = tw * th                                         # (m_pad, 1)

    iw = jnp.maximum(jnp.minimum(qx2, tx2) - jnp.maximum(qx1, tx1), 0.0)
    ih = jnp.maximum(jnp.minimum(qy2, ty2) - jnp.maximum(qy1, ty1), 0.0)
    inter = iw * ih                                          # (m_pad, tile_n)
    union = area_q + area_t - inter

    # enclosing box extent is nonnegative by construction -> no clamp needed
    ew = jnp.maximum(qx2, tx2) - jnp.minimum(qx1, tx1)
    eh = jnp.maximum(qy2, ty2) - jnp.minimum(qy1, ty1)
    enc = ew * eh

    if approx_recip:
        iou = inter * pl.reciprocal(union, approx=True)
        giou = iou - (enc - union) * pl.reciprocal(enc, approx=True)
    else:
        iou = inter / union
        giou = iou - (enc - union) / enc

    ct_ref[...] = w_bbox * cost_bbox + w_class * cost_class - w_giou * giou


def _choose_n_tiling(N: int, tile_n_max: int):
    """Pick (n_pad, tile_n, n_tiles): tile_n multiple of 128, even #tiles when
    there is enough work so both v7x TensorCores get balanced work."""
    n128 = _round_up(max(N, 1), 128)
    if n128 <= 128:
        return 128, 128, 1
    n_tiles = max(2, _cdiv(n128, tile_n_max))
    if n_tiles % 2:
        n_tiles += 1
    tile_n = _round_up(_cdiv(n128, n_tiles), 128)
    n_tiles = _cdiv(n128, tile_n)
    return n_tiles * tile_n, tile_n, n_tiles


def hungarian_cost_matrix(pred_logits, pred_boxes, tgt_ids, tgt_bbox,
                          cost_class: float = 1.0,
                          cost_bbox: float = 1.0,
                          cost_giou: float = 1.0,
                          tile_n_max: int = 1024,
                          approx_recip: bool = False):
    """Returns the (bs, num_queries, M) assignment cost matrix C."""
    bs, nq, nc = pred_logits.shape
    N = bs * nq
    M = int(tgt_bbox.shape[0])

    nc_pad = _round_up(nc, 128)
    m_pad = _round_up(max(M, 1), 8)          # targets live on sublanes: pad to 8
    n_pad, tile_n, n_tiles = _choose_n_tiling(N, tile_n_max)

    f32 = jnp.float32
    dummy_box = jnp.array([0.5, 0.5, 1.0, 1.0], f32)   # non-degenerate padding

    # ---- logits (N, nc) -> padded (n_pad, nc_pad); bf16 fast path possible but
    #      kept f32 to preserve bit-level parity with the reference.
    logits = pred_logits.reshape(N, nc).astype(f32)
    logits = jnp.pad(logits, ((0, n_pad - N), (0, nc_pad - nc)))

    # ---- per-query box features, precomputed: rows = cx,cy,w,h,x1,y1,x2,y2
    boxes = pred_boxes.reshape(N, 4).astype(f32)
    if n_pad > N:
        boxes = jnp.concatenate([boxes, jnp.tile(dummy_box, (n_pad - N, 1))], 0)
    qcx, qcy, qw, qh = boxes[:, 0], boxes[:, 1], boxes[:, 2], boxes[:, 3]
    qfeat = jnp.stack([qcx, qcy, qw, qh,
                       qcx - 0.5 * qw, qcy - 0.5 * qh,
                       qcx + 0.5 * qw, qcy + 0.5 * qh], axis=0)   # (8, n_pad)

    # ---- per-target box features + one-hot class selector
    tgt = tgt_bbox.astype(f32)
    if m_pad > M:
        tgt = jnp.concatenate([tgt, jnp.tile(dummy_box, (m_pad - M, 1))], 0)
    tcx, tcy, tw, th = tgt[:, 0], tgt[:, 1], tgt[:, 2], tgt[:, 3]
    tfeat = jnp.stack([tcx, tcy, tw, th,
                       tcx - 0.5 * tw, tcy - 0.5 * th,
                       tcx + 0.5 * tw, tcy + 0.5 * th], axis=1)   # (m_pad, 8)

    ids = jnp.pad(tgt_ids.astype(jnp.int32), (0, m_pad - M))
    onehot = jax.nn.one_hot(ids, nc_pad, dtype=f32)               # (m_pad, nc_pad)

    # ---- explicit scoped-VMEM budget (v5e default is only 16 MiB) ----
    vmem_est = 4 * (2 * tile_n * nc_pad        # logits tile (double-buffered)
                    + 2 * 8 * tile_n           # query features
                    + 2 * m_pad * nc_pad       # one-hot (grid-invariant)
                    + 2 * m_pad * 128          # target features (lane-padded)
                    + 2 * m_pad * tile_n)      # output tile
    vmem_limit = int(min(max(2 * vmem_est, 16 * 1024 * 1024), 48 * 1024 * 1024))

    kernel = functools.partial(_cost_kernel,
                               w_class=float(cost_class),
                               w_bbox=float(cost_bbox),
                               w_giou=float(cost_giou),
                               approx_recip=bool(approx_recip))

    C_T = pl.pallas_call(
        kernel,
        out_shape=jax.ShapeDtypeStruct((m_pad, n_pad), f32),
        grid=(n_tiles,),
        in_specs=[
            pl.BlockSpec((tile_n, nc_pad), lambda i: (i, 0)),   # logits
            pl.BlockSpec((8, tile_n), lambda i: (0, i)),        # query features
            pl.BlockSpec((m_pad, nc_pad), lambda i: (0, 0)),    # one-hot (invariant)
            pl.BlockSpec((m_pad, 8), lambda i: (0, 0)),         # target features
        ],
        out_specs=pl.BlockSpec((m_pad, tile_n), lambda i: (0, i)),
        compiler_params=pltpu.CompilerParams(
            dimension_semantics=("parallel",),
            vmem_limit_bytes=vmem_limit),
    )(logits, qfeat, onehot, tfeat)

    return C_T[:M, :N].T.reshape(bs, nq, M)


def _reference_cost_matrix(pred_logits, pred_boxes, tgt_ids, tgt_bbox,
                           cost_class=1.0, cost_bbox=1.0, cost_giou=1.0):
    """Pure-JAX reference mirroring the PyTorch forward (cost matrix only)."""
    bs, nq, nc = pred_logits.shape
    out_prob = jax.nn.sigmoid(pred_logits.reshape(-1, nc))
    out_bbox = pred_boxes.reshape(-1, 4)
    alpha, gamma = 0.25, 2.0
    neg = (1 - alpha) * out_prob ** gamma * -jnp.log(1 - out_prob + 1e-8)
    pos = alpha * (1 - out_prob) ** gamma * -jnp.log(out_prob + 1e-8)
    c_class = (pos - neg)[:, tgt_ids]
    c_bbox = jnp.abs(out_bbox[:, None, :] - tgt_bbox[None, :, :]).sum(-1)

    def to_xyxy(b):
        cx, cy, w, h = b[:, 0], b[:, 1], b[:, 2], b[:, 3]
        return jnp.stack([cx - 0.5 * w, cy - 0.5 * h, cx + 0.5 * w, cy + 0.5 * h], -1)

    b1, b2 = to_xyxy(out_bbox), to_xyxy(tgt_bbox)
    a1 = (b1[:, 2] - b1[:, 0]) * (b1[:, 3] - b1[:, 1])
    a2 = (b2[:, 2] - b2[:, 0]) * (b2[:, 3] - b2[:, 1])
    lt = jnp.maximum(b1[:, None, :2], b2[None, :, :2])
    rb = jnp.minimum(b1[:, None, 2:], b2[None, :, 2:])
    wh = jnp.clip(rb - lt, 0)
    inter = wh[..., 0] * wh[..., 1]
    union = a1[:, None] + a2[None, :] - inter
    iou = inter / union
    lt2 = jnp.minimum(b1[:, None, :2], b2[None, :, :2])
    rb2 = jnp.maximum(b1[:, None, 2:], b2[None, :, 2:])
    wh2 = jnp.clip(rb2 - lt2, 0)
    enc = wh2[..., 0] * wh2[..., 1]
    giou = iou - (enc - union) / enc
    C = cost_bbox * c_bbox + cost_class * c_class + cost_giou * (-giou)
    return C.reshape(bs, nq, -1)


if __name__ == "__main__":
    key = jax.random.PRNGKey(0)
    bs, num_queries, num_classes = 2, 8, 16
    sizes = [3, 5]                       # per-image number of target boxes
    M = sum(sizes)

    k1, k2, k3, k4 = jax.random.split(key, 4)
    pred_logits = jax.random.normal(k1, (bs, num_queries, num_classes), jnp.float32)
    pred_boxes = jax.nn.sigmoid(jax.random.normal(k2, (bs, num_queries, 4), jnp.float32))
    tgt_ids = jax.random.randint(k3, (M,), 0, num_classes, jnp.int32)
    cxcy = 0.2 + 0.6 * jax.random.uniform(k4, (M, 2), jnp.float32)
    wh = 0.1 + 0.2 * jax.random.uniform(jax.random.fold_in(k4, 1), (M, 2), jnp.float32)
    tgt_bbox = jnp.concatenate([cxcy, wh], axis=-1)

    # HungarianMatcher __init__ parameters (deterministic, no checkpoint):
    w_class, w_bbox, w_giou = 1.0, 1.0, 1.0

    C = hungarian_cost_matrix(pred_logits, pred_boxes, tgt_ids, tgt_bbox,
                              cost_class=w_class, cost_bbox=w_bbox, cost_giou=w_giou)
    C = jax.block_until_ready(C)

    C_ref = _reference_cost_matrix(pred_logits, pred_boxes, tgt_ids, tgt_bbox,
                                   cost_class=w_class, cost_bbox=w_bbox, cost_giou=w_giou)
    assert C.shape == (bs, num_queries, M)
    assert jnp.allclose(C, C_ref, atol=1e-4, rtol=1e-4), "Pallas kernel mismatch vs reference"

    # TODO(synk): scipy.optimize.linear_sum_assignment over the per-image splits of C
    # (the Hungarian solve) is sequential, data-dependent host-side control flow with
    # no clean Pallas equivalent; the kernel produces the cost matrix C that feeds it.

    print("KERNEL_OK")
</pallas_src>

<mosaic_0001>
module attributes {stable_mosaic.version = 11 : i64} {
  func.func @_cost_kernel(%arg0: i32, %arg1: memref<128x128xf32, #tpu.memory_space<vmem>>, %arg2: memref<8x128xf32, #tpu.memory_space<vmem>>, %arg3: memref<8x128xf32, #tpu.memory_space<vmem>>, %arg4: memref<8x8xf32, #tpu.memory_space<vmem>>, %arg5: memref<8x128xf32, #tpu.memory_space<vmem>>) attributes {dimension_semantics = [#tpu.dimension_semantics<parallel>], iteration_bounds = array<i64: 1>, scalar_prefetch = 0 : i64, scratch_operands = 0 : i64, tpu.core_type = #tpu.core_type<tc>, window_params = [{transform_indices = @transform_0, window_bounds = array<i64: 128, 128>}, {transform_indices = @transform_1, window_bounds = array<i64: 8, 128>}, {pipeline_mode = #tpu.pipeline_mode<synchronous>, transform_indices = @transform_2, window_bounds = array<i64: 8, 128>}, {pipeline_mode = #tpu.pipeline_mode<synchronous>, transform_indices = @transform_3, window_bounds = array<i64: 8, 8>}, {transform_indices = @transform_4, window_bounds = array<i64: 8, 128>}]} {
    %c0 = arith.constant 0 : index
    %c0_0 = arith.constant 0 : index
    %0 = vector.load %arg3[%c0, %c0_0] : memref<8x128xf32, #tpu.memory_space<vmem>>, vector<8x128xf32>
    %c0_1 = arith.constant 0 : index
    %c0_2 = arith.constant 0 : index
    %1 = vector.load %arg1[%c0_1, %c0_2] : memref<128x128xf32, #tpu.memory_space<vmem>>, vector<128x128xf32>
    %cst = arith.constant dense<0.000000e+00> : vector<8x128xf32>
    %2 = tpu.matmul %0, %1, %cst {dimension_numbers = #tpu.dot_dimension_numbers<[1], [1], [0], [0], [0, 0, 1, 0], [], []>} : vector<8x128xf32>, vector<128x128xf32>, vector<8x128xf32> -> vector<8x128xf32>
    %cst_3 = arith.constant 0.000000e+00 : f32
    %3 = vector.broadcast %cst_3 : f32 to vector<8x128xf32>
    %4 = arith.subf %3, %2 : vector<8x128xf32>
    %5 = math.exp %4 : vector<8x128xf32>
    %cst_4 = arith.constant 1.000000e+00 : f32
    %6 = vector.broadcast %cst_4 : f32 to vector<8x128xf32>
    %7 = arith.addf %6, %5 : vector<8x128xf32>
    %cst_5 = arith.constant 1.000000e+00 : f32
    %8 = vector.broadcast %cst_5 : f32 to vector<8x128xf32>
    %9 = arith.divf %8, %7 : vector<8x128xf32>
    %cst_6 = arith.constant 9.99999993E-9 : f32
    %10 = vector.broadcast %cst_6 : f32 to vector<8x128xf32>
    %11 = arith.addf %9, %10 : vector<8x128xf32>
    %12 = math.log %11 : vector<8x128xf32>
    %cst_7 = arith.constant 0.000000e+00 : f32
    %13 = vector.broadcast %cst_7 : f32 to vector<8x128xf32>
    %14 = arith.subf %13, %12 : vector<8x128xf32>
    %cst_8 = arith.constant 1.000000e+00 : f32
    %15 = vector.broadcast %cst_8 : f32 to vector<8x128xf32>
    %16 = arith.subf %15, %9 : vector<8x128xf32>
    %cst_9 = arith.constant 1.000000e+00 : f32
    %17 = vector.broadcast %cst_9 : f32 to vector<8x128xf32>
    %18 = arith.subf %17, %9 : vector<8x128xf32>
    %19 = arith.mulf %16, %18 : vector<8x128xf32>
    %cst_10 = arith.constant 2.500000e-01 : f32
    %20 = vector.broadcast %cst_10 : f32 to vector<8x128xf32>
    %21 = arith.mulf %20, %19 : vector<8x128xf32>
    %22 = arith.mulf %21, %14 : vector<8x128xf32>
    %23 = arith.mulf %9, %9 : vector<8x128xf32>
    %cst_11 = arith.constant 7.500000e-01 : f32
    %24 = vector.broadcast %cst_11 : f32 to vector<8x128xf32>
    %25 = arith.mulf %24, %23 : vector<8x128xf32>
    %26 = arith.addf %2, %14 : vector<8x128xf32>
    %27 = arith.mulf %25, %26 : vector<8x128xf32>
    %28 = arith.subf %22, %27 : vector<8x128xf32>
    %c0_12 = arith.constant 0 : index
    %c0_13 = arith.constant 0 : index
    %29 = vector.load %arg2[%c0_12, %c0_13] : memref<8x128xf32, #tpu.memory_space<vmem>>, vector<8x128xf32>
    %30 = vector.extract_strided_slice %29 {offsets = [0, 0], sizes = [1, 128], strides = [1, 1]} : vector<8x128xf32> to vector<1x128xf32>
    %31 = vector.extract_strided_slice %29 {offsets = [1, 0], sizes = [1, 128], strides = [1, 1]} : vector<8x128xf32> to vector<1x128xf32>
    %32 = vector.extract_strided_slice %29 {offsets = [2, 0], sizes = [1, 128], strides = [1, 1]} : vector<8x128xf32> to vector<1x128xf32>
    %33 = vector.extract_strided_slice %29 {offsets = [3, 0], sizes = [1, 128], strides = [1, 1]} : vector<8x128xf32> to vector<1x128xf32>
    %34 = vector.extract_strided_slice %29 {offsets = [4, 0], sizes = [1, 128], strides = [1, 1]} : vector<8x128xf32> to vector<1x128xf32>
    %35 = vector.extract_strided_slice %29 {offsets = [5, 0], sizes = [1, 128], strides = [1, 1]} : vector<8x128xf32> to vector<1x128xf32>
    %36 = vector.extract_strided_slice %29 {offsets = [6, 0], sizes = [1, 128], strides = [1, 1]} : vector<8x128xf32> to vector<1x128xf32>
    %37 = vector.extract_strided_slice %29 {offsets = [7, 0], sizes = [1, 128], strides = [1, 1]} : vector<8x128xf32> to vector<1x128xf32>
    %c0_14 = arith.constant 0 : index
    %c0_15 = arith.constant 0 : index
    %38 = vector.load %arg4[%c0_14, %c0_15] : memref<8x8xf32, #tpu.memory_space<vmem>>, vector<8x8xf32>
    %39 = vector.extract_strided_slice %38 {offsets = [0, 0], sizes = [8, 1], strides = [1, 1]} : vector<8x8xf32> to vector<8x1xf32>
    %40 = vector.extract_strided_slice %38 {offsets = [0, 1], sizes = [8, 1], strides = [1, 1]} : vector<8x8xf32> to vector<8x1xf32>
    %41 = vector.extract_strided_slice %38 {offsets = [0, 2], sizes = [8, 1], strides = [1, 1]} : vector<8x8xf32> to vector<8x1xf32>
    %42 = vector.extract_strided_slice %38 {offsets = [0, 3], sizes = [8, 1], strides = [1, 1]} : vector<8x8xf32> to vector<8x1xf32>
    %43 = vector.extract_strided_slice %38 {offsets = [0, 4], sizes = [8, 1], strides = [1, 1]} : vector<8x8xf32> to vector<8x1xf32>
    %44 = vector.extract_strided_slice %38 {offsets = [0, 5], sizes = [8, 1], strides = [1, 1]} : vector<8x8xf32> to vector<8x1xf32>
    %45 = vector.extract_strided_slice %38 {offsets = [0, 6], sizes = [8, 1], strides = [1, 1]} : vector<8x8xf32> to vector<8x1xf32>
    %46 = vector.extract_strided_slice %38 {offsets = [0, 7], sizes = [8, 1], strides = [1, 1]} : vector<8x8xf32> to vector<8x1xf32>
    %47 = vector.broadcast %39 : vector<8x1xf32> to vector<8x128xf32>
    %48 = vector.broadcast %30 : vector<1x128xf32> to vector<8x128xf32>
    %49 = arith.subf %47, %48 : vector<8x128xf32>
    %50 = math.absf %49 : vector<8x128xf32>
    %51 = vector.broadcast %40 : vector<8x1xf32> to vector<8x128xf32>
    %52 = vector.broadcast %31 : vector<1x128xf32> to vector<8x128xf32>
    %53 = arith.subf %51, %52 : vector<8x128xf32>
    %54 = math.absf %53 : vector<8x128xf32>
    %55 = arith.addf %50, %54 : vector<8x128xf32>
    %56 = vector.broadcast %41 : vector<8x1xf32> to vector<8x128xf32>
    %57 = vector.broadcast %32 : vector<1x128xf32> to vector<8x128xf32>
    %58 = arith.subf %56, %57 : vector<8x128xf32>
    %59 = math.absf %58 : vector<8x128xf32>
    %60 = arith.addf %55, %59 : vector<8x128xf32>
    %61 = vector.broadcast %42 : vector<8x1xf32> to vector<8x128xf32>
    %62 = vector.broadcast %33 : vector<1x128xf32> to vector<8x128xf32>
    %63 = arith.subf %61, %62 : vector<8x128xf32>
    %64 = math.absf %63 : vector<8x128xf32>
    %65 = arith.addf %60, %64 : vector<8x128xf32>
    %66 = arith.mulf %32, %33 : vector<1x128xf32>
    %67 = arith.mulf %41, %42 : vector<8x1xf32>
    %68 = vector.broadcast %36 : vector<1x128xf32> to vector<8x128xf32>
    %69 = vector.broadcast %45 : vector<8x1xf32> to vector<8x128xf32>
    %70 = arith.minimumf %68, %69 : vector<8x128xf32>
    %71 = vector.broadcast %34 : vector<1x128xf32> to vector<8x128xf32>
    %72 = vector.broadcast %43 : vector<8x1xf32> to vector<8x128xf32>
    %73 = arith.maximumf %71, %72 : vector<8x128xf32>
    %74 = arith.subf %70, %73 : vector<8x128xf32>
    %cst_16 = arith.constant 0.000000e+00 : f32
    %75 = vector.broadcast %cst_16 : f32 to vector<8x128xf32>
    %76 = arith.maximumf %74, %75 : vector<8x128xf32>
    %77 = vector.broadcast %37 : vector<1x128xf32> to vector<8x128xf32>
    %78 = vector.broadcast %46 : vector<8x1xf32> to vector<8x128xf32>
    %79 = arith.minimumf %77, %78 : vector<8x128xf32>
    %80 = vector.broadcast %35 : vector<1x128xf32> to vector<8x128xf32>
    %81 = vector.broadcast %44 : vector<8x1xf32> to vector<8x128xf32>
    %82 = arith.maximumf %80, %81 : vector<8x128xf32>
    %83 = arith.subf %79, %82 : vector<8x128xf32>
    %cst_17 = arith.constant 0.000000e+00 : f32
    %84 = vector.broadcast %cst_17 : f32 to vector<8x128xf32>
    %85 = arith.maximumf %83, %84 : vector<8x128xf32>
    %86 = arith.mulf %76, %85 : vector<8x128xf32>
    %87 = vector.broadcast %66 : vector<1x128xf32> to vector<8x128xf32>
    %88 = vector.broadcast %67 : vector<8x1xf32> to vector<8x128xf32>
    %89 = arith.addf %87, %88 : vector<8x128xf32>
    %90 = arith.subf %89, %86 : vector<8x128xf32>
    %91 = vector.broadcast %36 : vector<1x128xf32> to vector<8x128xf32>
    %92 = vector.broadcast %45 : vector<8x1xf32> to vector<8x128xf32>
    %93 = arith.maximumf %91, %92 : vector<8x128xf32>
    %94 = vector.broadcast %34 : vector<1x128xf32> to vector<8x128xf32>
    %95 = vector.broadcast %43 : vector<8x1xf32> to vector<8x128xf32>
    %96 = arith.minimumf %94, %95 : vector<8x128xf32>
    %97 = arith.subf %93, %96 : vector<8x128xf32>
    %98 = vector.broadcast %37 : vector<1x128xf32> to vector<8x128xf32>
    %99 = vector.broadcast %46 : vector<8x1xf32> to vector<8x128xf32>
    %100 = arith.maximumf %98, %99 : vector<8x128xf32>
    %101 = vector.broadcast %35 : vector<1x128xf32> to vector<8x128xf32>
    %102 = vector.broadcast %44 : vector<8x1xf32> to vector<8x128xf32>
    %103 = arith.minimumf %101, %102 : vector<8x128xf32>
    %104 = arith.subf %100, %103 : vector<8x128xf32>
    %105 = arith.mulf %97, %104 : vector<8x128xf32>
    %106 = arith.divf %86, %90 : vector<8x128xf32>
    %107 = arith.subf %105, %90 : vector<8x128xf32>
    %108 = arith.divf %107, %105 : vector<8x128xf32>
    %109 = arith.subf %106, %108 : vector<8x128xf32>
    %cst_18 = arith.constant 1.000000e+00 : f32
    %110 = vector.broadcast %cst_18 : f32 to vector<8x128xf32>
    %111 = arith.mulf %110, %65 : vector<8x128xf32>
    %cst_19 = arith.constant 1.000000e+00 : f32
    %112 = vector.broadcast %cst_19 : f32 to vector<8x128xf32>
    %113 = arith.mulf %112, %28 : vector<8x128xf32>
    %114 = arith.addf %111, %113 : vector<8x128xf32>
    %cst_20 = arith.constant 1.000000e+00 : f32
    %115 = vector.broadcast %cst_20 : f32 to vector<8x128xf32>
    %116 = arith.mulf %115, %109 : vector<8x128xf32>
    %117 = arith.subf %114, %116 : vector<8x128xf32>
    %c0_21 = arith.constant 0 : index
    %c0_22 = arith.constant 0 : index
    %118 = vector.load %arg5[%c0_21, %c0_22] : memref<8x128xf32, #tpu.memory_space<vmem>>, vector<8x128xf32>
    tpu.vector_store %arg5[%c0_21, %c0_22], %117 {strides = array<i32>} : memref<8x128xf32, #tpu.memory_space<vmem>>, vector<8x128xf32>,
    return
  }
  func.func @transform_0(%arg0: i32) -> (i32, i32) {
    %c0_i32 = arith.constant 0 : i32
    %c0_i32_0 = arith.constant 0 : i32
    return %arg0, %c0_i32 : i32, i32
  }
  func.func @transform_1(%arg0: i32) -> (i32, i32) {
    %c0_i32 = arith.constant 0 : i32
    %c0_i32_0 = arith.constant 0 : i32
    return %c0_i32, %arg0 : i32, i32
  }
  func.func @transform_2(%arg0: i32) -> (i32, i32) {
    %c0_i32 = arith.constant 0 : i32
    %c0_i32_0 = arith.constant 0 : i32
    %c0_i32_1 = arith.constant 0 : i32
    return %c0_i32, %c0_i32_0 : i32, i32
  }
  func.func @transform_3(%arg0: i32) -> (i32, i32) {
    %c0_i32 = arith.constant 0 : i32
    %c0_i32_0 = arith.constant 0 : i32
    %c0_i32_1 = arith.constant 0 : i32
    return %c0_i32, %c0_i32_0 : i32, i32
  }
  func.func @transform_4(%arg0: i32) -> (i32, i32) {
    %c0_i32 = arith.constant 0 : i32
    %c0_i32_0 = arith.constant 0 : i32
    return %c0_i32, %arg0 : i32, i32
  }
}

</mosaic_0001>

<llo_original>
// kernel: tpu_custom_call.1
$region0: #{tpu_custom_call.1}
  #allocation0 [shape = 'u32[]', space=smem, size = 0x4, offset = 0x4, fixed_abs, tag = 'smem constant byte address 0x4 - core index']
  #allocation1 [shape = 'u32[144,128]{1,0:T(1,128)}', space=vmem, size = 0x12000, scoped, tag = 'internal scratch']
  %s0 = inlined_call_operand.hbm [shape: f32[128,128], index: 0, kind: input, shape index: {}]
  %s1 = inlined_call_operand.hbm [shape: f32[8,128], index: 1, kind: input, shape index: {}]
  %s2 = inlined_call_operand.hbm [shape: f32[8,128], index: 2, kind: input, shape index: {}]
  %s3 = inlined_call_operand.vmem [shape: f32[8,8], index: 3, kind: input, shape index: {}]
  %s4 = inlined_call_operand.hbm [shape: f32[8,128], index: 4, kind: output, shape index: {}]
  %s5 = sld [smem:[#allocation0]]
  $region38: #{tpu_custom_call.1} parent=0
    _
  %s7 = ssub.s32 1, %s5
  %s8 = scalar_select 0, %s7, %s5
  $region1: #{tpu_custom_call.1} parent=0
    #allocation2 [shape = 'u8[65536]{0}', space=vmem, size = 0x10000, scoped, tag = 'input window, operand 0, single buffered']
    #allocation3 [shape = 's32[1]{0}', space=sflag, size = 0x4, scoped, tag = 'scoped memory for tpu_custom_call.1']
    #allocation4 [shape = 's32[1]{0}', space=sflag, size = 0x4, scoped, tag = 'scoped memory for tpu_custom_call.1']
    #allocation5 [shape = 'u8[4096]{0}', space=vmem, size = 0x1000, scoped, tag = 'input window, operand 1, single buffered']
    #allocation6 [shape = 's32[1]{0}', space=sflag, size = 0x4, scoped, tag = 'scoped memory for tpu_custom_call.1']
    #allocation7 [shape = 'u8[4096]{0}', space=vmem, size = 0x1000, scoped, tag = 'input window, operand 2, single buffered']
    #allocation8 [shape = 'u8[4096]{0}', space=vmem, size = 0x1000, scoped, tag = 'output window, operand 0, single buffered']
    %9 = vsyncpa [#allocation3], 0
    %10 = vsyncpa [#allocation6], 0
    %11 = vsyncpa [#allocation4], 0
    // Predicated region
    $region2: #{tpu_custom_call.1} parent=1 // pred_check
      _
    $region3: #{tpu_custom_call.1} parent=1 // pred_check_branch
      %13 = sbr.rel (0) target = $region5
    $region4: #{tpu_custom_call.1} parent=1 // pred_region
      %s15 = ssub.s32 2048, 2048
      %16 = vsyncadd [#allocation3], %s15
      %s17 = sshll.u32 [#allocation2], 4
      %s18 = int_to_ptr.vmem [resolvable:$true] %s17
      %23 = dma.hbm_to_vmem [thread:$0]  %s0, 2048, %s18, [#allocation3], 128, 128, 8
    $region5: #{tpu_custom_call.1} parent=1 // pred_fallthru
      _
    // Predicated region
    $region6: #{tpu_custom_call.1} parent=1 // pred_check
      _
    $region7: #{tpu_custom_call.1} parent=1 // pred_check_branch
      %25 = sbr.rel (0) target = $region9
    $region8: #{tpu_custom_call.1} parent=1 // pred_region
      %s27 = ssub.s32 128, 128
      %28 = vsyncadd [#allocation6], %s27
      %s30 = sshll.u32 [#allocation5], 4
      %s31 = int_to_ptr.vmem [resolvable:$true] %s30
      %33 = dma.hbm_to_vmem [thread:$0]  %s1, 128, %s31, [#allocation6]
    $region9: #{tpu_custom_call.1} parent=1 // pred_fallthru
      _
    // Predicated region
    $region10: #{tpu_custom_call.1} parent=1 // pred_check
      _
    $region11: #{tpu_custom_call.1} parent=1 // pred_check_branch
      %35 = sbr.rel (0) target = $region13
    $region12: #{tpu_custom_call.1} parent=1 // pred_region
      %s37 = ssub.s32 128, 128
      %38 = vsyncadd [#allocation6], %s37
      %s40 = sshll.u32 [#allocation7], 4
      %s41 = int_to_ptr.vmem [resolvable:$true] %s40
      %43 = dma.hbm_to_vmem [thread:$0]  %s2, 128, %s41, [#allocation6]
    $region13: #{tpu_custom_call.1} parent=1 // pred_fallthru
      _
    // Predicated region
    $region14: #{tpu_custom_call.1} parent=1 // pred_check
      _
    $region15: #{tpu_custom_call.1} parent=1 // pred_check_branch
      %45 = sbr.rel (0) target = $region17
    $region16: #{tpu_custom_call.1} parent=1 // pred_region
      _
    $region17: #{tpu_custom_call.1} parent=1 // pred_fallthru
      _
    // Predicated region
    $region18: #{tpu_custom_call.1} parent=1 // pred_check
      _
    $region19: #{tpu_custom_call.1} parent=1 // pred_check_branch
      %47 = sbr.rel (0) target = $region21
    $region20: #{tpu_custom_call.1} parent=1 // pred_region
      %48 = dma.done [#allocation3], 2048
    $region21: #{tpu_custom_call.1} parent=1 // pred_fallthru
      _
    // Predicated region
    $region22: #{tpu_custom_call.1} parent=1 // pred_check
      _
    $region23: #{tpu_custom_call.1} parent=1 // pred_check_branch
      %50 = sbr.rel (0) target = $region25
    $region24: #{tpu_custom_call.1} parent=1 // pred_region
      %51 = dma.done [#allocation6], 128
    $region25: #{tpu_custom_call.1} parent=1 // pred_fallthru
      _
    // Predicated region
    $region26: #{tpu_custom_call.1} parent=1 // pred_check
      _
    $region27: #{tpu_custom_call.1} parent=1 // pred_check_branch
      %53 = sbr.rel (0) target = $region29
    $region28: #{tpu_custom_call.1} parent=1 // pred_region
      %54 = dma.done [#allocation6], 128
    $region29: #{tpu_custom_call.1} parent=1 // pred_fallthru
      _
    %v55 = vld [vmem:[#allocation7] sm:$0xff]
    %v56 = vld [vmem:[#allocation2] sm:$0xff]
    %v57 = vld [vmem:[#allocation2 + $0x8] sm:$0xff]
    %v58 = vld [vmem:[#allocation2 + $0x10] sm:$0xff]
    %v59 = vld [vmem:[#allocation2 + $0x18] sm:$0xff]
    %v60 = vld [vmem:[#allocation2 + $0x20] sm:$0xff]
    %v61 = vld [vmem:[#allocation2 + $0x28] sm:$0xff]
    %v62 = vld [vmem:[#allocation2 + $0x30] sm:$0xff]
    %v63 = vld [vmem:[#allocation2 + $0x38] sm:$0xff]
    %v64 = vld [vmem:[#allocation2 + $0x40] sm:$0xff]
    %v65 = vld [vmem:[#allocation2 + $0x48] sm:$0xff]
    %v66 = vld [vmem:[#allocation2 + $0x50] sm:$0xff]
    %v67 = vld [vmem:[#allocation2 + $0x58] sm:$0xff]
    %v68 = vld [vmem:[#allocation2 + $0x60] sm:$0xff]
    %v69 = vld [vmem:[#allocation2 + $0x68] sm:$0xff]
    %v70 = vld [vmem:[#allocation2 + $0x70] sm:$0xff]
    %v71 = vld [vmem:[#allocation2 + $0x78] sm:$0xff]
    %72 = vmatprep.subr.mxu0 0.0
    %73 = vmatpush1.xpose.msra.mxu0 %v56
    %74 = vmatprep.subr.mxu0 0.0
    %75 = vmatpush1.xpose.msra.mxu0 %v57
    %76 = vmatprep.subr.mxu0 0.0
    %77 = vmatpush1.xpose.msra.mxu0 %v58
    %78 = vmatprep.subr.mxu0 0.0
    %79 = vmatpush1.xpose.msra.mxu0 %v59
    %80 = vmatprep.subr.mxu0 0.0
    %81 = vmatpush1.xpose.msra.mxu0 %v60
    %82 = vmatprep.subr.mxu0 0.0
    %83 = vmatpush1.xpose.msra.mxu0 %v61
    %84 = vmatprep.subr.mxu0 0.0
    %85 = vmatpush1.xpose.msra.mxu0 %v62
    %86 = vmatprep.subr.mxu0 0.0
    %87 = vmatpush1.xpose.msra.mxu0 %v63
    %88 = vmatprep.subr.mxu0 0.0
    %89 = vmatpush1.xpose.msra.mxu0 %v64
    %90 = vmatprep.subr.mxu0 0.0
    %91 = vmatpush1.xpose.msra.mxu0 %v65
    %92 = vmatprep.subr.mxu0 0.0
    %93 = vmatpush1.xpose.msra.mxu0 %v66
    %94 = vmatprep.subr.mxu0 0.0
    %95 = vmatpush1.xpose.msra.mxu0 %v67
    %96 = vmatprep.subr.mxu0 0.0
    %97 = vmatpush1.xpose.msra.mxu0 %v68
    %98 = vmatprep.subr.mxu0 0.0
    %99 = vmatpush1.xpose.msra.mxu0 %v69
    %100 = vmatprep.subr.mxu0 0.0
    %101 = vmatpush1.xpose.msra.mxu0 %v70
    %102 = vmatprep.subr.mxu0 0.0
    %103 = vmatpush1.xpose.msra.mxu0 %v71
    %104 = vmatprep.subr.mxu0 0.0
    %105 = vmatpush1.xpose.msra.mxu0 0.0
    %106 = vmatprep.subr.mxu0 0.0
    %107 = vmatpush1.xpose.msra.mxu0 0.0
    %108 = vmatprep.subr.mxu0 0.0
    %109 = vmatpush1.xpose.msra.mxu0 0.0
    %110 = vmatprep.subr.mxu0 0.0
    %111 = vmatpush1.xpose.msra.mxu0 0.0
    %112 = vmatprep.subr.mxu0 0.0
    %113 = vmatpush1.xpose.msra.mxu0 0.0
    %114 = vmatprep.subr.mxu0 0.0
    %115 = vmatpush1.xpose.msra.mxu0 0.0
    %116 = vmatprep.subr.mxu0 0.0
    %117 = vmatpush1.xpose.msra.mxu0 0.0
    %118 = vmatprep.subr.mxu0 0.0
    %119 = vmatpush1.xpose.msra.mxu0 0.0
    %120 = vmatprep.subr.mxu0 0.0
    %121 = vmatpush1.xpose.msra.mxu0 0.0
    %122 = vmatprep.subr.mxu0 0.0
    %123 = vmatpush1.xpose.msra.mxu0 0.0
    %124 = vmatprep.subr.mxu0 0.0
    %125 = vmatpush1.xpose.msra.mxu0 0.0
    %126 = vmatprep.subr.mxu0 0.0
    %127 = vmatpush1.xpose.msra.mxu0 0.0
    %128 = vmatprep.subr.mxu0 0.0
    %129 = vmatpush1.xpose.msra.mxu0 0.0
    %130 = vmatprep.subr.mxu0 0.0
    %131 = vmatpush1.xpose.msra.mxu0 0.0
    %132 = vmatprep.subr.mxu0 0.0
    %133 = vmatpush1.xpose.msra.mxu0 0.0
    %134 = vmatprep.subr.mxu0 0.0
    %135 = vmatpush1.xpose.msra.mxu0 0.0
    %136 = vmatprep.mubr.f32.mxu0 0.0
    %137 = vmatmul.mubr.f32.gmra.mrb[0].mxu0 %v55
    %v138 = vpop.f32.mrb[0].mxu0
    %v139 = vadd.f32 0.0, %v138
    %v140 = vpop.f32.mrb[0].mxu0
    %141 = vdwg.mxu0
    %v142 = vsub.f32 0.0, %v139
    %v143 = vmul.f32 %v142, 1.442695
    %v144 = vpow.pop %v143
    %v145 = vadd.f32 %v144, 1.0
    %v146 = vrcp.pop %v145
    %v147 = vmul.f32 1.0, %v146
    %v148 = vadd.f32 %v147, 1e-08
    %v149 = vlog2.pop %v148
    %v150 = vmul.f32 %v149, 0.6931472
    %v151 = vsub.f32 0.0, %v150
    %v152 = vsub.f32 1.0, %v147
    %v153 = vmul.f32 %v152, %v152
    %v154 = vmul.f32 %v153, 0.25
    %v155 = vmul.f32 %v154, %v151
    %v156 = vmul.f32 %v147, %v147
    %v157 = vmul.f32 %v156, 0.75
    %v158 = vadd.f32 %v139, %v151
    %v159 = vmul.f32 %v157, %v158
    %v160 = vsub.f32 %v155, %v159
    %v161 = vld [vmem:[#allocation5] sm:$0xff]
    %v162 = vld [vmem:[%s3] sm:$0xff]
    %164 = vset.pattern.permute.xlu0 0
    %165 = vperm.xlu0 %164, %v162
    %v166 = vpop.permute.xlu0 %165
    %v168 = vlaneseq
    %v169 = vshrl.u32 %v168, 7
    %v170 = vsub.s32 0, %v169
    %v171 = vrot.slane %v161, %v170
    %v172 = vsub.f32 %v166, %v171
    %v173 = vand.u32 2147483647, %v172
    %174 = vset.pattern.permute.xlu0 1
    %175 = vperm.xlu0 %174, %v162
    %v176 = vpop.permute.xlu0 %175
    %v178 = vlaneseq
    %v179 = vshrl.u32 %v178, 7
    %v180 = vsub.s32 1, %v179
    %v181 = vrot.slane %v161, %v180
    %v182 = vsub.f32 %v176, %v181
    %v183 = vand.u32 2147483647, %v182
    %v184 = vadd.f32 %v173, %v183
    %185 = vset.pattern.permute.xlu0 2
    %186 = vperm.xlu0 %185, %v162
    %v187 = vpop.permute.xlu0 %186
    %v189 = vlaneseq
    %v190 = vshrl.u32 %v189, 7
    %v191 = vsub.s32 2, %v190
    %v192 = vrot.slane %v161, %v191
    %v193 = vsub.f32 %v187, %v192
    %v194 = vand.u32 2147483647, %v193
    %v195 = vadd.f32 %v184, %v194
    %196 = vset.pattern.permute.xlu0 3
    %197 = vperm.xlu0 %196, %v162
    %v198 = vpop.permute.xlu0 %197
    %v200 = vlaneseq
    %v201 = vshrl.u32 %v200, 7
    %v202 = vsub.s32 3, %v201
    %v203 = vrot.slane %v161, %v202
    %v204 = vsub.f32 %v198, %v203
    %v205 = vand.u32 2147483647, %v204
    %v206 = vadd.f32 %v195, %v205
    %v208 = vrot.slane %v161, 1
    %v210 = vmul.f32 %v161, %v208
    %211 = vrot.lane.b32.xlu0 %v162, 127
    %v212 = vpop.permute.xlu0 %211
    %v214 = vmul.f32 %v162, %v212
    %v215 = vlaneseq
    %v216 = vshrl.u32 %v215, 7
    %v217 = vsub.s32 6, %v216
    %v218 = vrot.slane %v161, %v217
    %219 = vset.pattern.permute.xlu0 6
    %220 = vperm.xlu0 %219, %v162
    %v221 = vpop.permute.xlu0 %220
    %v223 = vmin.f32 %v218, %v221
    %v224 = vlaneseq
    %v225 = vshrl.u32 %v224, 7
    %v226 = vsub.s32 4, %v225
    %v227 = vrot.slane %v161, %v226
    %228 = vset.pattern.permute.xlu0 4
    %229 = vperm.xlu0 %228, %v162
    %v230 = vpop.permute.xlu0 %229
    %v232 = vmax.f32 %v227, %v230
    %v233 = vsub.f32 %v223, %v232
    %v234 = vmax.f32 %v233, 0.0
    %v235 = vlaneseq
    %v236 = vshrl.u32 %v235, 7
    %v237 = vsub.s32 7, %v236
    %v238 = vrot.slane %v161, %v237
    %239 = vset.pattern.permute.xlu0 7
    %240 = vperm.xlu0 %239, %v162
    %v241 = vpop.permute.xlu0 %240
    %v243 = vmin.f32 %v238, %v241
    %v244 = vlaneseq
    %v245 = vshrl.u32 %v244, 7
    %v246 = vsub.s32 5, %v245
    %v247 = vrot.slane %v161, %v246
    %248 = vset.pattern.permute.xlu0 5
    %249 = vperm.xlu0 %248, %v162
    %v250 = vpop.permute.xlu0 %249
    %v252 = vmax.f32 %v247, %v250
    %v253 = vsub.f32 %v243, %v252
    %v254 = vmax.f32 %v253, 0.0
    %v255 = vmul.f32 %v234, %v254
    %v256 = vlaneseq
    %v257 = vshrl.u32 %v256, 7
    %v258 = vsub.s32 2, %v257
    %v259 = vrot.slane %v210, %v258
    %261 = vset.pattern.permute.xlu0 2
    %262 = vperm.xlu0 %261, %v214
    %v263 = vpop.permute.xlu0 %262
    %v265 = vadd.f32 %v259, %v263
    %v266 = vsub.f32 %v265, %v255
    %v267 = vmax.f32 %v218, %v221
    %v268 = vmin.f32 %v227, %v230
    %v269 = vsub.f32 %v267, %v268
    %v270 = vmax.f32 %v238, %v241
    %v271 = vmin.f32 %v247, %v250
    %v272 = vsub.f32 %v270, %v271
    %v273 = vmul.f32 %v269, %v272
    %v274 = vrcp.pop %v266
    %v275 = vmul.f32 %v255, %v274
    %v276 = vsub.f32 %v273, %v266
    %v277 = vrcp.pop %v273
    %v278 = vmul.f32 %v276, %v277
    %v279 = vsub.f32 %v275, %v278
    %v280 = vadd.f32 %v206, %v160
    %v281 = vsub.f32 %v280, %v279
    %282 = vst [vmem:[#allocation8] sm:$0xff] %v281
    // Predicated region
    $region30: #{tpu_custom_call.1} parent=1 // pred_check
      _
    $region31: #{tpu_custom_call.1} parent=1 // pred_check_branch
      %284 = sbr.rel (0) target = $region33
    $region32: #{tpu_custom_call.1} parent=1 // pred_region
      %s286 = ssub.s32 128, 128
      %287 = vsyncadd [#allocation4], %s286
      %s289 = sshll.u32 [#allocation8], 4
      %s290 = int_to_ptr.vmem [resolvable:$true] %s289
      %292 = dma.vmem_to_hbm [thread:$0]  %s290, 128, %s4, [#allocation4]
    $region33: #{tpu_custom_call.1} parent=1 // pred_fallthru
      _
    // Predicated region
    $region34: #{tpu_custom_call.1} parent=1 // pred_check
      _
    $region35: #{tpu_custom_call.1} parent=1 // pred_check_branch
      %294 = sbr.rel (0) target = $region37
    $region36: #{tpu_custom_call.1} parent=1 // pred_region
      %295 = dma.done [#allocation4], 128
    $region37: #{tpu_custom_call.1} parent=1 // pred_fallthru
      _
    %296 = vsyncpa [#allocation3], 1
    %297 = vsyncpa [#allocation6], 1
    %298 = vsyncpa [#allocation4], 1

</llo_original>
